<compile_context>
chip_gen: v6e
topology: v6e:2x2x1
jax: 0.10.0
libtpu: 0.0.40
codegen_flags: <defaults>
</compile_context>

<pallas_src>
import jax
import jax.numpy as jnp
import numpy as np
from jax.experimental import pallas as pl
from jax.experimental.pallas import tpu as pltpu

_LANES = 128
_SUBLANES = 8
_TM_MAX = 4096      # rows per tile: 4096 * 128 * 4 B = 2 MiB per input block
_NUM_SHARDS = 2     # enables the 2-TC split on v7x; harmless on v5e/v6e


def _cdiv(a, b):
    return -(-a // b)


def _round_up(x, m):
    return _cdiv(x, m) * m


def _mel_sse_kernel(mel_ref, melt_ref, out_ref):
    """Accumulate sum((mel - mel_target)^2) into a lane-dense (8,128) block."""
    @pl.when(pl.program_id(1) == 0)
    def _():
        out_ref[...] = jnp.zeros_like(out_ref)

    d = mel_ref[...] - melt_ref[...]
    # Fold the (tm, 128) tile down to (8, 128) with pure VPU adds; the final
    # cross-lane / cross-sublane reduce happens once, outside the kernel.
    out_ref[...] += (d * d).reshape(-1, _SUBLANES, _LANES).sum(axis=0)


def _mel_sse(mel, mel_target):
    """Sum of squared errors over the whole mel tensor (Pallas streaming reduce)."""
    total = mel.size
    flat = mel.reshape(-1)
    flat_t = mel_target.reshape(-1)

    rows = _cdiv(total, _LANES)
    rows_per_shard = _round_up(_cdiv(rows, _NUM_SHARDS), _SUBLANES)
    tm = min(_TM_MAX, rows_per_shard)                 # multiple of 8 by construction
    tiles_per_shard = _cdiv(rows_per_shard, tm)
    padded_rows = _NUM_SHARDS * tiles_per_shard * tm
    padded_total = padded_rows * _LANES

    if padded_total != total:
        pad = padded_total - total
        flat = jnp.pad(flat, (0, pad))                # zeros contribute 0 to SSE
        flat_t = jnp.pad(flat_t, (0, pad))

    mel2 = flat.reshape(padded_rows, _LANES)
    melt2 = flat_t.reshape(padded_rows, _LANES)

    in_map = lambda c, i: (c * tiles_per_shard + i, 0)

    partials = pl.pallas_call(
        _mel_sse_kernel,
        out_shape=jax.ShapeDtypeStruct((_NUM_SHARDS * _SUBLANES, _LANES),
                                       jnp.float32),
        grid=(_NUM_SHARDS, tiles_per_shard),
        in_specs=[
            pl.BlockSpec((tm, _LANES), in_map),
            pl.BlockSpec((tm, _LANES), in_map),
        ],
        # Output block depends only on the shard axis -> resident accumulator
        # across the (last, "arbitrary") reduction axis.
        out_specs=pl.BlockSpec((_SUBLANES, _LANES), lambda c, i: (c, 0)),
        compiler_params=pltpu.CompilerParams(
            dimension_semantics=("parallel", "arbitrary")),
        cost_estimate=pl.CostEstimate(
            flops=3 * padded_total,
            transcendentals=0,
            bytes_accessed=2 * padded_total * 4
            + _NUM_SHARDS * _SUBLANES * _LANES * 4),
    )(mel2, melt2)

    return jnp.sum(partials)


def fastspeech_v2_loss(mel, duration_predicted, pitch_predicted, energy_predicted,
                       mel_target, alignment, pitch, energy, **batch):
    mel = mel.astype(jnp.float32)
    mel_target = mel_target.astype(jnp.float32)

    # Large mel MSE: Pallas streaming reduction.
    mel_loss = _mel_sse(mel, mel_target) / jnp.float32(mel.size)

    # Tiny [B, L] terms: plain jnp (cheaper than dragging them into the kernel).
    duration_loss = jnp.mean(jnp.abs(duration_predicted.astype(jnp.float32)
                                     - alignment.astype(jnp.float32)))
    pitch_loss = jnp.mean((pitch_predicted.astype(jnp.float32)
                           - pitch.astype(jnp.float32)) ** 2)
    energy_loss = jnp.mean((energy_predicted.astype(jnp.float32)
                            - energy.astype(jnp.float32)) ** 2)

    loss = mel_loss + duration_loss + pitch_loss + energy_loss
    return {
        "loss": loss,
        "mel_loss": mel_loss,
        "duration_loss": duration_loss,
        "pitch_loss": pitch_loss,
        "energy_loss": energy_loss,
    }


def _reference(mel, dur_p, pit_p, en_p, mel_t, align, pitch, energy):
    mel = mel.astype(jnp.float32)
    mel_t = mel_t.astype(jnp.float32)
    mel_loss = jnp.mean((mel - mel_t) ** 2)
    dur_loss = jnp.mean(jnp.abs(dur_p - align.astype(jnp.float32)))
    pitch_loss = jnp.mean((pit_p - pitch.astype(jnp.float32)) ** 2)
    energy_loss = jnp.mean((en_p - energy.astype(jnp.float32)) ** 2)
    return {
        "loss": mel_loss + dur_loss + pitch_loss + energy_loss,
        "mel_loss": mel_loss,
        "duration_loss": dur_loss,
        "pitch_loss": pitch_loss,
        "energy_loss": energy_loss,
    }


if __name__ == "__main__":
    key = jax.random.PRNGKey(0)
    B, T, M = 2, 8, 80      # mel: [batch, frames, n_mels]
    L = 8                   # phoneme sequence length

    ks = jax.random.split(key, 8)
    mel = jax.random.normal(ks[0], (B, T, M), dtype=jnp.float32)
    mel_target = jax.random.normal(ks[1], (B, T, M), dtype=jnp.float32)
    duration_predicted = jax.random.normal(ks[2], (B, L), dtype=jnp.float32)
    alignment = jax.random.randint(ks[3], (B, L), 0, 10, dtype=jnp.int32)
    pitch_predicted = jax.random.normal(ks[4], (B, L), dtype=jnp.float32)
    pitch = jax.random.normal(ks[5], (B, L), dtype=jnp.float32)
    energy_predicted = jax.random.normal(ks[6], (B, L), dtype=jnp.float32)
    energy = jax.random.normal(ks[7], (B, L), dtype=jnp.float32)

    out = fastspeech_v2_loss(mel, duration_predicted, pitch_predicted,
                             energy_predicted, mel_target, alignment,
                             pitch, energy)
    out = jax.tree_util.tree_map(jax.block_until_ready, out)

    ref = _reference(mel, duration_predicted, pitch_predicted, energy_predicted,
                     mel_target, alignment, pitch, energy)
    for k in out:
        np.testing.assert_allclose(np.asarray(out[k]), np.asarray(ref[k]),
                                   rtol=1e-5, atol=1e-5)

    print("KERNEL_OK")
</pallas_src>

<mosaic_0001>
module attributes {stable_mosaic.version = 11 : i64} {
  func.func @_mel_sse_kernel(%arg0: i32, %arg1: i32, %arg2: memref<8x128xf32, #tpu.memory_space<vmem>>, %arg3: memref<8x128xf32, #tpu.memory_space<vmem>>, %arg4: memref<8x128xf32, #tpu.memory_space<vmem>>) attributes {dimension_semantics = [#tpu.dimension_semantics<parallel>, #tpu.dimension_semantics<arbitrary>], iteration_bounds = array<i64: 2, 1>, scalar_prefetch = 0 : i64, scratch_operands = 0 : i64, tpu.core_type = #tpu.core_type<tc>, window_params = [{transform_indices = @transform_0, window_bounds = array<i64: 8, 128>}, {transform_indices = @transform_1, window_bounds = array<i64: 8, 128>}, {transform_indices = @transform_2, window_bounds = array<i64: 8, 128>}]} {
    %c0_i32 = arith.constant 0 : i32
    %0 = arith.cmpi eq, %arg1, %c0_i32 : i32
    %1 = arith.extui %0 : i1 to i32
    %c0_i32_0 = arith.constant 0 : i32
    %2 = arith.cmpi ne, %1, %c0_i32_0 : i32
    scf.if %2 {
      %cst_8 = arith.constant 0.000000e+00 : f32
      %12 = vector.broadcast %cst_8 : f32 to vector<8x128xf32>
      %c0_9 = arith.constant 0 : index
      %c0_10 = arith.constant 0 : index
      %13 = vector.load %arg4[%c0_9, %c0_10] : memref<8x128xf32, #tpu.memory_space<vmem>>, vector<8x128xf32>
      tpu.vector_store %arg4[%c0_9, %c0_10], %12 {strides = array<i32>} : memref<8x128xf32, #tpu.memory_space<vmem>>, vector<8x128xf32>,
    } else {
    }
    %c0 = arith.constant 0 : index
    %c0_1 = arith.constant 0 : index
    %3 = vector.load %arg2[%c0, %c0_1] : memref<8x128xf32, #tpu.memory_space<vmem>>, vector<8x128xf32>
    %c0_2 = arith.constant 0 : index
    %c0_3 = arith.constant 0 : index
    %4 = vector.load %arg3[%c0_2, %c0_3] : memref<8x128xf32, #tpu.memory_space<vmem>>, vector<8x128xf32>
    %5 = arith.subf %3, %4 : vector<8x128xf32>
    %c0_4 = arith.constant 0 : index
    %c0_5 = arith.constant 0 : index
    %6 = vector.load %arg4[%c0_4, %c0_5] : memref<8x128xf32, #tpu.memory_space<vmem>>, vector<8x128xf32>
    %7 = arith.mulf %5, %5 : vector<8x128xf32>
    %8 = vector.shape_cast %7 : vector<8x128xf32> to vector<1x8x128xf32>
    %cst = arith.constant dense<0.000000e+00> : vector<8x128xf32>
    %9 = vector.multi_reduction <add>, %8, %cst [0] : vector<1x8x128xf32> to vector<8x128xf32>
    %10 = arith.addf %6, %9 : vector<8x128xf32>
    %c0_6 = arith.constant 0 : index
    %c0_7 = arith.constant 0 : index
    %11 = vector.load %arg4[%c0_6, %c0_7] : memref<8x128xf32, #tpu.memory_space<vmem>>, vector<8x128xf32>
    tpu.vector_store %arg4[%c0_6, %c0_7], %10 {strides = array<i32>} : memref<8x128xf32, #tpu.memory_space<vmem>>, vector<8x128xf32>,
    return
  }
  func.func @transform_0(%arg0: i32, %arg1: i32) -> (i32, i32) {
    %c1_i32 = arith.constant 1 : i32
    %0 = arith.muli %arg0, %c1_i32 : i32
    %1 = arith.addi %0, %arg1 : i32
    %c0_i32 = arith.constant 0 : i32
    %c0_i32_0 = arith.constant 0 : i32
    return %1, %c0_i32 : i32, i32
  }
  func.func @transform_1(%arg0: i32, %arg1: i32) -> (i32, i32) {
    %c1_i32 = arith.constant 1 : i32
    %0 = arith.muli %arg0, %c1_i32 : i32
    %1 = arith.addi %0, %arg1 : i32
    %c0_i32 = arith.constant 0 : i32
    %c0_i32_0 = arith.constant 0 : i32
    return %1, %c0_i32 : i32, i32
  }
  func.func @transform_2(%arg0: i32, %arg1: i32) -> (i32, i32) {
    %c0_i32 = arith.constant 0 : i32
    %c0_i32_0 = arith.constant 0 : i32
    return %arg0, %c0_i32 : i32, i32
  }
}

</mosaic_0001>

<llo_original>
// kernel: tpu_custom_call.1
$region0: #{tpu_custom_call.1}
  #allocation0 [shape = 'u32[]', space=smem, size = 0x4, offset = 0x4, fixed_abs, tag = 'smem constant byte address 0x4 - core index']
  #allocation1 [shape = 'u32[144,128]{1,0:T(1,128)}', space=vmem, size = 0x12000, scoped, tag = 'internal scratch']
  %s0 = inlined_call_operand.hbm [shape: f32[16,128], index: 0, kind: input, shape index: {}]
  %s1 = inlined_call_operand.hbm [shape: f32[16,128], index: 1, kind: input, shape index: {}]
  %s2 = inlined_call_operand.hbm [shape: f32[16,128], index: 2, kind: output, shape index: {}]
  %s3 = sld [smem:[#allocation0]]
  $region53: #{tpu_custom_call.1} parent=0
    _
  %s5 = ssub.s32 1, %s3
  %s6 = scalar_select 0, %s5, %s3
  $region1: #{tpu_custom_call.1} parent=0
    #allocation2 [shape = 'u8[8192]{0}', space=vmem, size = 0x2000, scoped, tag = 'input window, operand 0']
    #allocation3 [shape = 's32[2]{0}', space=sflag, size = 0x8, scoped, tag = 'scoped memory for tpu_custom_call.1']
    #allocation4 [shape = 's32[2]{0}', space=sflag, size = 0x8, scoped, tag = 'scoped memory for tpu_custom_call.1']
    #allocation5 [shape = 'u8[8192]{0}', space=vmem, size = 0x2000, scoped, tag = 'input window, operand 1']
    #allocation6 [shape = 's32[2]{0}', space=sflag, size = 0x8, scoped, tag = 'scoped memory for tpu_custom_call.1']
    #allocation7 [shape = 'u8[8192]{0}', space=vmem, size = 0x2000, scoped, tag = 'output window, operand 0']
    %7 = vsyncpa [#allocation3], 0
    %s8 = scalar_lea.sflag [#allocation3], 1
    %9 = vsyncpa %s8, 0
    %10 = vsyncpa [#allocation6], 0
    %s11 = scalar_lea.sflag [#allocation6], 1
    %12 = vsyncpa %s11, 0
    %13 = vsyncpa [#allocation4], 0
    %s14 = scalar_lea.sflag [#allocation4], 1
    %15 = vsyncpa %s14, 0
    loop: start=0, step=1, limit=4
    $region2: #{tpu_custom_call.1} parent=1 // loop_pre_header
      _
    $region3: #{tpu_custom_call.1} parent=1 // loop_header
      %s17 = sphi 0, %s21
      %p18 = scmp.ge.s32.totalorder %s17, 4
      %s24 = sphi 0, %s36
      %s25 = sphi 0, %s32
      %s26 = sphi 0, %s24
      %s27 = sphi 0, %s25
      %s28 = sphi 0, %s26
      %s29 = sphi 0, %s27
      %s41 = sphi 0, %s43
      %s44 = sphi 0, %s41
      %s45 = sphi 0, %s44
      %s61 = sphi 0, %s45
      %s69 = sphi 0, %s71
      %s72 = sphi 0, %s69
      %s73 = sphi 0, %s72
      %s89 = sphi 0, %s73
      %s95 = sphi 0, %s97
      %s98 = sphi 0, %s95
      %s99 = sphi 0, %s98
      %s115 = sphi 0, %s99
    $region4: #{tpu_custom_call.1} parent=1 // loop_header_branch
      %20 = sbr.rel (%p18) target = $region8
    $region5: #{tpu_custom_call.1} parent=1 // loop_body
      %s22 = ssub.s32 %s17, 1
      %s23 = ssub.s32 %s17, 2
      %s30 = sadd.s32 1, %s25
      %p31 = scmp.ge.s32.totalorder %s30, 1
      %s32 = scalar_select %p31, 0, %s30
      %s33 = sadd.s32 1, %s24
      %s34 = scalar_select %p31, %s33, %s24
      %p35 = scmp.ge.s32.totalorder %s34, 2
      %s36 = scalar_select %p35, 0, %s34
      %s37 = sadd.s32 %s24, %s25
      %s38 = sadd.s32 %s36, %s32
      %s39 = ssub.s32 %s37, %s38
      %p40 = scmp.eq.s32.totalorder %s39, 0
      %s42 = sadd.s32 %s41, 1
      %s43 = scalar_select %p40, %s41, %s42
      %p46 = pneg %p40
      %p47 = scmp.eq.s32.totalorder %s17, 1
      %p48 = por %p46, %p47
      %p49 = scmp.ne.s32.totalorder %s41, %s44
      %p50 = scmp.eq.s32.totalorder %s17, 0
      %p51 = por %p49, %p50
      %p52 = scmp.ne.s32.totalorder %s41, %s44
      %p53 = scmp.eq.s32.totalorder %s22, 1
      %p54 = por %p52, %p53
      %p55 = scmp.ne.s32.totalorder %s44, %s45
      %p56 = scmp.eq.s32.totalorder %s22, 0
      %p57 = por %p55, %p56
      %p58 = scmp.ne.s32.totalorder %s44, %s45
      %p59 = scmp.eq.s32.totalorder %s23, 1
      %p60 = por %p58, %p59
      %p62 = scmp.ne.s32.totalorder %s45, %s61
      %p63 = scmp.eq.s32.totalorder %s23, 0
      %p64 = por %p62, %p63
      %s65 = sadd.s32 %s24, %s25
      %s66 = sadd.s32 %s36, %s32
      %s67 = ssub.s32 %s65, %s66
      %p68 = scmp.eq.s32.totalorder %s67, 0
      %s70 = sadd.s32 %s69, 1
      %s71 = scalar_select %p68, %s69, %s70
      %p74 = pneg %p68
      %p75 = scmp.eq.s32.totalorder %s17, 1
      %p76 = por %p74, %p75
      %p77 = scmp.ne.s32.totalorder %s69, %s72
      %p78 = scmp.eq.s32.totalorder %s17, 0
      %p79 = por %p77, %p78
      %p80 = scmp.ne.s32.totalorder %s69, %s72
      %p81 = scmp.eq.s32.totalorder %s22, 1
      %p82 = por %p80, %p81
      %p83 = scmp.ne.s32.totalorder %s72, %s73
      %p84 = scmp.eq.s32.totalorder %s22, 0
      %p85 = por %p83, %p84
      %p86 = scmp.ne.s32.totalorder %s72, %s73
      %p87 = scmp.eq.s32.totalorder %s23, 1
      %p88 = por %p86, %p87
      %p90 = scmp.ne.s32.totalorder %s73, %s89
      %p91 = scmp.eq.s32.totalorder %s23, 0
      %p92 = por %p90, %p91
      %s93 = ssub.s32 %s24, %s36
      %p94 = scmp.eq.s32.totalorder %s93, 0
      %s96 = sadd.s32 %s95, 1
      %s97 = scalar_select %p94, %s95, %s96
      %p100 = pneg %p94
      %p101 = scmp.eq.s32.totalorder %s17, 1
      %p102 = por %p100, %p101
      %p103 = scmp.ne.s32.totalorder %s95, %s98
      %p104 = scmp.eq.s32.totalorder %s17, 0
      %p105 = por %p103, %p104
      %p106 = scmp.ne.s32.totalorder %s95, %s98
      %p107 = scmp.eq.s32.totalorder %s22, 1
      %p108 = por %p106, %p107
      %p109 = scmp.ne.s32.totalorder %s98, %s99
      %p110 = scmp.eq.s32.totalorder %s22, 0
      %p111 = por %p109, %p110
      %p112 = scmp.ne.s32.totalorder %s98, %s99
      %p113 = scmp.eq.s32.totalorder %s23, 1
      %p114 = por %p112, %p113
      %p116 = scmp.ne.s32.totalorder %s99, %s115
      %p117 = scmp.eq.s32.totalorder %s23, 0
      %p118 = por %p116, %p117
      %p119 = scmp.le.s32.totalorder 1, %s17
      %p120 = scmp.lt.s32.totalorder %s17, 3
      %p121 = pnand %p119, %p120
      %p122 = pneg %p121
      // Predicated region
      $region9: #{tpu_custom_call.1} parent=5 // pred_check
        _
      $region10: #{tpu_custom_call.1} parent=5 // pred_check_branch
        %124 = sbr.rel (%p121) target = $region12
      $region11: #{tpu_custom_call.1} parent=5 // pred_region
        %s125 = ssub.s32 %s17, 1
      $region12: #{tpu_custom_call.1} parent=5 // pred_fallthru
        _
      %p126 = scmp.lt.s32.totalorder %s17, 2
      // Predicated region
      $region13: #{tpu_custom_call.1} parent=5 // pred_check
        %p127 = pneg %p126
      $region14: #{tpu_custom_call.1} parent=5 // pred_check_branch
        %129 = sbr.rel (%p127) target = $region16
      $region15: #{tpu_custom_call.1} parent=5 // pred_region
        // Predicated region
        $region17: #{tpu_custom_call.1} parent=15 // pred_check
          %p130 = pneg %p51
        $region18: #{tpu_custom_call.1} parent=15 // pred_check_branch
          %132 = sbr.rel (%p130) target = $region20
        $region19: #{tpu_custom_call.1} parent=15 // pred_region
          %s133 = sand.u32 %s41, 1
          %s134 = scalar_lea.sflag [#allocation3], %s133
          %s135 = sand.u32 %s41, 1
          %s136 = smul.addr %s135, 8
          %s137 = scalar_lea.vmem [#allocation2], %s136
          %s138 = sadd.s32 %s24, %s25
          %s140 = ssub.s32 128, 128
          %141 = vsyncadd %s134, %s140
          %s142 = smul.addr %s138, 128
          %s143 = scalar_lea.hbm %s0, %s142
          %s145 = sshll.u32 %s137, 4
          %s146 = int_to_ptr.vmem [resolvable:$true] %s145
          %148 = dma.hbm_to_vmem [thread:$0]  %s143, 128, %s146, %s134
        $region20: #{tpu_custom_call.1} parent=15 // pred_fallthru
          _
        // Predicated region
        $region21: #{tpu_custom_call.1} parent=15 // pred_check
          %p149 = pneg %p79
        $region22: #{tpu_custom_call.1} parent=15 // pred_check_branch
          %151 = sbr.rel (%p149) target = $region24
        $region23: #{tpu_custom_call.1} parent=15 // pred_region
          %s152 = sand.u32 %s69, 1
          %s153 = scalar_lea.sflag [#allocation6], %s152
          %s154 = sand.u32 %s69, 1
          %s155 = smul.addr %s154, 8
          %s156 = scalar_lea.vmem [#allocation5], %s155
          %s157 = sadd.s32 %s24, %s25
          %s159 = ssub.s32 128, 128
          %160 = vsyncadd %s153, %s159
          %s161 = smul.addr %s157, 128
          %s162 = scalar_lea.hbm %s1, %s161
          %s164 = sshll.u32 %s156, 4
          %s165 = int_to_ptr.vmem [resolvable:$true] %s164
          %167 = dma.hbm_to_vmem [thread:$0]  %s162, 128, %s165, %s153
        $region24: #{tpu_custom_call.1} parent=15 // pred_fallthru
          _
      $region16: #{tpu_custom_call.1} parent=5 // pred_fallthru
        _
      %p168 = scmp.le.s32.totalorder 1, %s17
      %p169 = scmp.lt.s32.totalorder %s17, 3
      %p170 = pnand %p168, %p169
      %p171 = pneg %p170
      // Predicated region
      $region25: #{tpu_custom_call.1} parent=5 // pred_check
        _
      $region26: #{tpu_custom_call.1} parent=5 // pred_check_branch
        %173 = sbr.rel (%p170) target = $region28
      $region27: #{tpu_custom_call.1} parent=5 // pred_region
        %s174 = ssub.s32 %s17, 1
        %s175 = sand.u32 %s44, 1
        %s176 = scalar_lea.sflag [#allocation3], %s175
        %s177 = sand.u32 %s44, 1
        %s178 = smul.addr %s177, 8
        %s179 = scalar_lea.vmem [#allocation2], %s178
        // Predicated region
        $region29: #{tpu_custom_call.1} parent=27 // pred_check
          %p180 = pneg %p57
        $region30: #{tpu_custom_call.1} parent=27 // pred_check_branch
          %182 = sbr.rel (%p180) target = $region32
        $region31: #{tpu_custom_call.1} parent=27 // pred_region
          %183 = dma.done %s176, 128
        $region32: #{tpu_custom_call.1} parent=27 // pred_fallthru
          _
        %s184 = sand.u32 %s72, 1
        %s185 = scalar_lea.sflag [#allocation6], %s184
        %s186 = sand.u32 %s72, 1
        %s187 = smul.addr %s186, 8
        %s188 = scalar_lea.vmem [#allocation5], %s187
        // Predicated region
        $region33: #{tpu_custom_call.1} parent=27 // pred_check
          %p189 = pneg %p85
        $region34: #{tpu_custom_call.1} parent=27 // pred_check_branch
          %191 = sbr.rel (%p189) target = $region36
        $region35: #{tpu_custom_call.1} parent=27 // pred_region
          %192 = dma.done %s185, 128
        $region36: #{tpu_custom_call.1} parent=27 // pred_fallthru
          _
        %s193 = sand.u32 %s44, 1
        %s194 = scalar_lea.sflag [#allocation3], %s193
        %s195 = sand.u32 %s44, 1
        %s196 = smul.addr %s195, 8
        %s197 = scalar_lea.vmem [#allocation2], %s196
        %p198 = pneg %p57
        %p199 = pneg %p54
        %s200 = sand.u32 %s72, 1
        %s201 = scalar_lea.sflag [#allocation6], %s200
        %s202 = sand.u32 %s72, 1
        %s203 = smul.addr %s202, 8
        %s204 = scalar_lea.vmem [#allocation5], %s203
        %p205 = pneg %p85
        %p206 = pneg %p82
        %p207 = pneg %p111
        %p208 = pneg %p108
        %s209 = sand.u32 %s98, 1
        %s210 = scalar_lea.sflag [#allocation4], %s209
        %s211 = sand.u32 %s98, 1
        %s212 = smul.addr %s211, 8
        %s213 = scalar_lea.vmem [#allocation7], %s212
        %s214 = sadd.s32 %s26, %s27
        %s215 = sadd.s32 %s26, %s27
        %p216 = scmp.eq.s32.totalorder %s27, 0
        // Predicated region
        $region37: #{tpu_custom_call.1} parent=27 // pred_check
          %p217 = pneg %p216
        $region38: #{tpu_custom_call.1} parent=27 // pred_check_branch
          %219 = sbr.rel (%p217) target = $region40
        $region39: #{tpu_custom_call.1} parent=27 // pred_region
          %220 = vst [vmem:[%s213] sm:$0xff] 0.0
        $region40: #{tpu_custom_call.1} parent=27 // pred_fallthru
          _
        %v221 = vld [vmem:[%s179] sm:$0xff]
        %v222 = vld [vmem:[%s188] sm:$0xff]
        %v223 = vsub.f32 %v221, %v222
        %v224 = vld [vmem:[%s213] sm:$0xff]
        %v225 = vmul.f32 %v223, %v223
        %v226 = vadd.f32 %v225, 0.0
        %v227 = vadd.f32 %v224, %v226
        %228 = vst [vmem:[%s213] sm:$0xff] %v227
        %s229 = sand.u32 %s98, 1
        %s230 = scalar_lea.sflag [#allocation4], %s229
        %s231 = sand.u32 %s98, 1
        %s232 = smul.addr %s231, 8
        %s233 = scalar_lea.vmem [#allocation7], %s232
        // Predicated region
        $region41: #{tpu_custom_call.1} parent=27 // pred_check
          %p234 = pneg %p108
        $region42: #{tpu_custom_call.1} parent=27 // pred_check_branch
          %236 = sbr.rel (%p234) target = $region44
        $region43: #{tpu_custom_call.1} parent=27 // pred_region
          %s238 = ssub.s32 128, 128
          %239 = vsyncadd %s230, %s238
          %s240 = smul.addr %s26, 128
          %s241 = scalar_lea.hbm %s2, %s240
          %s243 = sshll.u32 %s233, 4
          %s244 = int_to_ptr.vmem [resolvable:$true] %s243
          %246 = dma.vmem_to_hbm [thread:$0]  %s244, 128, %s241, %s230
        $region44: #{tpu_custom_call.1} parent=27 // pred_fallthru
          _
      $region28: #{tpu_custom_call.1} parent=5 // pred_fallthru
        _
      %p247 = scmp.le.s32.totalorder 2, %s17
      // Predicated region
      $region45: #{tpu_custom_call.1} parent=5 // pred_check
        %p248 = pneg %p247
      $region46: #{tpu_custom_call.1} parent=5 // pred_check_branch
        %250 = sbr.rel (%p248) target = $region48
      $region47: #{tpu_custom_call.1} parent=5 // pred_region
        %s251 = ssub.s32 %s17, 2
        // Predicated region
        $region49: #{tpu_custom_call.1} parent=47 // pred_check
          %p252 = pneg %p114
        $region50: #{tpu_custom_call.1} parent=47 // pred_check_branch
          %254 = sbr.rel (%p252) target = $region52
        $region51: #{tpu_custom_call.1} parent=47 // pred_region
          %s255 = sand.u32 %s99, 1
          %s256 = scalar_lea.sflag [#allocation4], %s255
          %s257 = sand.u32 %s99, 1
          %s258 = smul.addr %s257, 8
          %s259 = scalar_lea.vmem [#allocation7], %s258
          %260 = dma.done %s256, 128
        $region52: #{tpu_custom_call.1} parent=47 // pred_fallthru
          _
      $region48: #{tpu_custom_call.1} parent=5 // pred_fallthru
        _
    $region6: #{tpu_custom_call.1} parent=1 // loop_footer
      %s21 = sadd.s32 1, %s17
    $region7: #{tpu_custom_call.1} parent=1 // loop_footer_branch
      %16 = sbr.rel target = $region3
    $region8: #{tpu_custom_call.1} parent=1 // loop_exit
      _
    %261 = vsyncpa [#allocation3], 1
    %s262 = scalar_lea.sflag [#allocation3], 1
    %263 = vsyncpa %s262, 1
    %264 = vsyncpa [#allocation6], 1
    %s265 = scalar_lea.sflag [#allocation6], 1
    %266 = vsyncpa %s265, 1
    %267 = vsyncpa [#allocation4], 1
    %s268 = scalar_lea.sflag [#allocation4], 1
    %269 = vsyncpa %s268, 1

</llo_original>
